<compile_context>
chip_gen: v7x
topology: tpu7x:2x2x1
jax: 0.10.0
libtpu: 0.0.40
codegen_flags: <defaults>
</compile_context>

<pallas_src>
import jax
import jax.numpy as jnp
import numpy as np
from jax.experimental import pallas as pl
from jax.experimental.pallas import tpu as pltpu


def last_feat_kernel(x_ref, id_ref, w_ref, tbl_ref, o_ref):
    # x_ref:   (tm, feat_size)        f32 (or bf16 if caller pre-casts)
    # id_ref:  (tm, 1)                int32
    # w_ref:   (feat_size, latent)    bf16 (default) or f32 -- resident
    # tbl_ref: (vocab, latent)        f32  (ebd_weight + b)  -- resident
    # o_ref:   (tm, latent)           text_feat dtype
    #
    # Projection on the MXU in W's dtype, f32 accumulation.
    proj = jnp.dot(x_ref[...].astype(w_ref.dtype), w_ref[...],
                   preferred_element_type=jnp.float32)

    # In-kernel gather: one-hot(ids) @ table on the MXU (table stays f32).
    tm = id_ref.shape[0]
    vocab = tbl_ref.shape[0]
    ids = id_ref[...]                                               # (tm, 1)
    onehot = (ids == jax.lax.broadcasted_iota(jnp.int32, (tm, vocab), 1)
              ).astype(tbl_ref.dtype)                               # (tm, vocab)
    gathered = jnp.dot(onehot, tbl_ref[...],
                       preferred_element_type=jnp.float32)          # (tm, latent)

    o_ref[...] = (proj + gathered).astype(o_ref.dtype)


def prepare_last_feat_params(W, b, ebd_weight, *, matmul_dtype=jnp.bfloat16):
    """One-time parameter prep.  Call ONCE at init, never per forward.

    Folds the bias into the embedding table (every row gets exactly one
    one-hot hit, so table[id] reproduces ebd_weight[id] + b exactly) and
    casts W to the MXU matmul dtype (bf16 by default; pass jnp.float32 for
    exact f32 parity with the PyTorch reference).
    """
    table = (ebd_weight + b[None, :]).astype(jnp.float32)
    return {"W_mm": W.astype(matmul_dtype), "table": table}


def last_feat(text_feat, my_id, params, *, tm_max=512):
    """Hot-path forward.  No param prep, no output pad, no post-slice."""
    W = params["W_mm"]            # (feat_size, latent_dim)
    table = params["table"]       # (vocab, latent_dim), bias pre-folded
    bz, feat_size = text_feat.shape
    vocab, latent_dim = table.shape

    # One grid step for small batches; tile M at tm_max for large batches.
    tm = bz if bz <= tm_max else tm_max
    grid = (pl.cdiv(bz, tm),)

    ids2d = my_id.reshape(bz, 1)
    if ids2d.dtype != jnp.int32:
        ids2d = ids2d.astype(jnp.int32)

    out = pl.pallas_call(
        last_feat_kernel,
        out_shape=jax.ShapeDtypeStruct((bz, latent_dim), text_feat.dtype),
        grid=grid,
        in_specs=[
            pl.BlockSpec((tm, feat_size), lambda i: (i, 0)),         # x tile
            pl.BlockSpec((tm, 1), lambda i: (i, 0)),                 # ids tile
            pl.BlockSpec((feat_size, latent_dim), lambda i: (0, 0)),  # W (resident)
            pl.BlockSpec((vocab, latent_dim), lambda i: (0, 0)),      # table (resident)
        ],
        out_specs=pl.BlockSpec((tm, latent_dim), lambda i: (i, 0)),
        compiler_params=pltpu.CompilerParams(
            dimension_semantics=("parallel",)),
    )(text_feat, ids2d, W, table)

    return out


if __name__ == "__main__":
    # Module hyper-params (small, consistent with the forward)
    vocab_size = 16
    feat_size = 32
    latent_dim = 32
    padding_idx = 0  # only affects gradients in PyTorch; forward uses the row as-is
    bz = 8

    key = jax.random.PRNGKey(0)
    k_w, k_e, k_x, k_id = jax.random.split(key, 4)

    bound = 0.1
    # Deterministic "reset_parameters": uniform(-0.1, 0.1) for W and ebd, b = 0
    W = jax.random.uniform(k_w, (feat_size, latent_dim),
                           minval=-bound, maxval=bound, dtype=jnp.float32)
    b = jnp.zeros((latent_dim,), dtype=jnp.float32)
    ebd_weight = jax.random.uniform(k_e, (vocab_size, latent_dim),
                                    minval=-bound, maxval=bound,
                                    dtype=jnp.float32)

    text_feat = jax.random.normal(k_x, (bz, feat_size), dtype=jnp.float32)
    my_id = jax.random.randint(k_id, (bz,), 0, vocab_size, dtype=jnp.int32)

    # Pure-JAX reference for correctness
    ref = text_feat @ W + b[None, :] + ebd_weight[my_id]

    # Default (perf) path: bf16 projection operands, f32 accumulation, f32 gather.
    params_bf16 = prepare_last_feat_params(W, b, ebd_weight,
                                           matmul_dtype=jnp.bfloat16)
    out_bf16 = jax.block_until_ready(last_feat(text_feat, my_id, params_bf16))
    np.testing.assert_allclose(np.asarray(out_bf16), np.asarray(ref),
                               rtol=2e-2, atol=2e-2)

    # Exact-parity path: f32 matmul operands.
    params_f32 = prepare_last_feat_params(W, b, ebd_weight,
                                          matmul_dtype=jnp.float32)
    out_f32 = jax.block_until_ready(last_feat(text_feat, my_id, params_f32))
    np.testing.assert_allclose(np.asarray(out_f32), np.asarray(ref),
                               rtol=1e-5, atol=1e-5)

    print("KERNEL_OK")
</pallas_src>

<mosaic_0001>
module attributes {stable_mosaic.version = 11 : i64} {
  func.func @last_feat_kernel(%arg0: i32, %arg1: memref<8x32xf32, #tpu.memory_space<vmem>>, %arg2: memref<8x1xi32, #tpu.memory_space<vmem>>, %arg3: memref<32x32xbf16, #tpu.memory_space<vmem>>, %arg4: memref<16x32xf32, #tpu.memory_space<vmem>>, %arg5: memref<8x32xf32, #tpu.memory_space<vmem>>) attributes {dimension_semantics = [#tpu.dimension_semantics<parallel>], iteration_bounds = array<i64: 1>, scalar_prefetch = 0 : i64, scratch_operands = 0 : i64, tpu.core_type = #tpu.core_type<tc>, window_params = [{transform_indices = @transform_0, window_bounds = array<i64: 8, 32>}, {transform_indices = @transform_1, window_bounds = array<i64: 8, 1>}, {pipeline_mode = #tpu.pipeline_mode<synchronous>, transform_indices = @transform_2, window_bounds = array<i64: 32, 32>}, {pipeline_mode = #tpu.pipeline_mode<synchronous>, transform_indices = @transform_3, window_bounds = array<i64: 16, 32>}, {transform_indices = @transform_4, window_bounds = array<i64: 8, 32>}]} {
    %c0 = arith.constant 0 : index
    %c0_0 = arith.constant 0 : index
    %0 = vector.load %arg1[%c0, %c0_0] : memref<8x32xf32, #tpu.memory_space<vmem>>, vector<8x32xf32>
    %1 = arith.truncf %0 : vector<8x32xf32> to vector<8x32xbf16>
    %c0_1 = arith.constant 0 : index
    %c0_2 = arith.constant 0 : index
    %2 = vector.load %arg3[%c0_1, %c0_2] : memref<32x32xbf16, #tpu.memory_space<vmem>>, vector<32x32xbf16>
    %cst = arith.constant dense<0.000000e+00> : vector<8x32xf32>
    %3 = tpu.matmul %1, %2, %cst {dimension_numbers = #tpu.dot_dimension_numbers<[1], [0], [0], [1], [0, 0, 1, 1], [], []>} : vector<8x32xbf16>, vector<32x32xbf16>, vector<8x32xf32> -> vector<8x32xf32>
    %c0_3 = arith.constant 0 : index
    %c0_4 = arith.constant 0 : index
    %4 = vector.load %arg2[%c0_3, %c0_4] : memref<8x1xi32, #tpu.memory_space<vmem>>, vector<8x1xi32>
    %5 = tpu.iota {dimensions = array<i32: 1>} : vector<8x16xi32>
    %6 = vector.broadcast %4 : vector<8x1xi32> to vector<8x16xi32>
    %7 = arith.cmpi eq, %6, %5 : vector<8x16xi32>
    %8 = arith.extui %7 : vector<8x16xi1> to vector<8x16xi32>
    %9 = arith.sitofp %8 : vector<8x16xi32> to vector<8x16xf32>
    %c0_5 = arith.constant 0 : index
    %c0_6 = arith.constant 0 : index
    %10 = vector.load %arg4[%c0_5, %c0_6] : memref<16x32xf32, #tpu.memory_space<vmem>>, vector<16x32xf32>
    %cst_7 = arith.constant dense<0.000000e+00> : vector<8x32xf32>
    %11 = tpu.matmul %9, %10, %cst_7 {dimension_numbers = #tpu.dot_dimension_numbers<[1], [0], [0], [1], [0, 0, 1, 1], [], []>} : vector<8x16xf32>, vector<16x32xf32>, vector<8x32xf32> -> vector<8x32xf32>
    %12 = arith.addf %3, %11 : vector<8x32xf32>
    %c0_8 = arith.constant 0 : index
    %c0_9 = arith.constant 0 : index
    %13 = vector.load %arg5[%c0_8, %c0_9] : memref<8x32xf32, #tpu.memory_space<vmem>>, vector<8x32xf32>
    tpu.vector_store %arg5[%c0_8, %c0_9], %12 {strides = array<i32>} : memref<8x32xf32, #tpu.memory_space<vmem>>, vector<8x32xf32>,
    return
  }
  func.func @transform_0(%arg0: i32) -> (i32, i32) {
    %c0_i32 = arith.constant 0 : i32
    %c0_i32_0 = arith.constant 0 : i32
    return %arg0, %c0_i32 : i32, i32
  }
  func.func @transform_1(%arg0: i32) -> (i32, i32) {
    %c0_i32 = arith.constant 0 : i32
    %c0_i32_0 = arith.constant 0 : i32
    return %arg0, %c0_i32 : i32, i32
  }
  func.func @transform_2(%arg0: i32) -> (i32, i32) {
    %c0_i32 = arith.constant 0 : i32
    %c0_i32_0 = arith.constant 0 : i32
    %c0_i32_1 = arith.constant 0 : i32
    return %c0_i32, %c0_i32_0 : i32, i32
  }
  func.func @transform_3(%arg0: i32) -> (i32, i32) {
    %c0_i32 = arith.constant 0 : i32
    %c0_i32_0 = arith.constant 0 : i32
    %c0_i32_1 = arith.constant 0 : i32
    return %c0_i32, %c0_i32_0 : i32, i32
  }
  func.func @transform_4(%arg0: i32) -> (i32, i32) {
    %c0_i32 = arith.constant 0 : i32
    %c0_i32_0 = arith.constant 0 : i32
    return %arg0, %c0_i32 : i32, i32
  }
}

</mosaic_0001>

<llo_original>
// kernel: tpu_custom_call.1
$region0: #{tpu_custom_call.1}
  #allocation0 [shape = 'u32[]', space=smem, size = 0x4, offset = 0x4, fixed_abs, tag = 'smem constant byte address 0x4 - core index']
  #allocation1 [shape = 'u32[144,128]{1,0:T(1,128)}', space=vmem, size = 0x12000, scoped, tag = 'internal scratch']
  %s0 = inlined_call_operand.hbm [shape: f32[8,32], index: 0, kind: input, shape index: {}]
  %s1 = inlined_call_operand.vmem [shape: s32[8,1], index: 1, kind: input, shape index: {}]
  %s2 = inlined_call_operand.vmem [shape: bf16[32,32], index: 2, kind: input, shape index: {}]
  %s3 = inlined_call_operand.hbm [shape: f32[16,32], index: 3, kind: input, shape index: {}]
  %s4 = inlined_call_operand.hbm [shape: f32[8,32], index: 4, kind: output, shape index: {}]
  %s5 = sld [smem:[#allocation0]]
  $region34: #{tpu_custom_call.1} parent=0
    _
  %s7 = ssub.s32 1, %s5
  %s8 = scalar_select 0, %s7, %s5
  $region1: #{tpu_custom_call.1} parent=0
    #allocation2 [shape = 'u8[4096]{0}', space=vmem, size = 0x1000, scoped, tag = 'input window, operand 0, single buffered']
    #allocation3 [shape = 's32[1]{0}', space=sflag, size = 0x4, scoped, tag = 'scoped memory for tpu_custom_call.1']
    #allocation4 [shape = 's32[1]{0}', space=sflag, size = 0x4, scoped, tag = 'scoped memory for tpu_custom_call.1']
    #allocation5 [shape = 'u8[8192]{0}', space=vmem, size = 0x2000, scoped, tag = 'input window, operand 3, single buffered']
    #allocation6 [shape = 's32[1]{0}', space=sflag, size = 0x4, scoped, tag = 'scoped memory for tpu_custom_call.1']
    #allocation7 [shape = 'u8[4096]{0}', space=vmem, size = 0x1000, scoped, tag = 'output window, operand 0, single buffered']
    %9 = vsyncpa [#allocation3], 0
    %10 = vsyncpa [#allocation6], 0
    %11 = vsyncpa [#allocation4], 0
    // Predicated region
    $region2: #{tpu_custom_call.1} parent=1 // pred_check
      _
    $region3: #{tpu_custom_call.1} parent=1 // pred_check_branch
      %13 = sbr.rel (0) target = $region5
    $region4: #{tpu_custom_call.1} parent=1 // pred_region
      %s15 = ssub.s32 128, 128
      %16 = vsyncadd [#allocation3], %s15
      %s18 = sshll.u32 [#allocation2], 4
      %s19 = int_to_ptr.vmem [resolvable:$true] %s18
      %21 = dma.hbm_to_vmem [thread:$0]  %s0, 128, %s19, [#allocation3]
    $region5: #{tpu_custom_call.1} parent=1 // pred_fallthru
      _
    // Predicated region
    $region6: #{tpu_custom_call.1} parent=1 // pred_check
      _
    $region7: #{tpu_custom_call.1} parent=1 // pred_check_branch
      %23 = sbr.rel (0) target = $region9
    $region8: #{tpu_custom_call.1} parent=1 // pred_region
      _
    $region9: #{tpu_custom_call.1} parent=1 // pred_fallthru
      _
    // Predicated region
    $region10: #{tpu_custom_call.1} parent=1 // pred_check
      _
    $region11: #{tpu_custom_call.1} parent=1 // pred_check_branch
      %25 = sbr.rel (0) target = $region13
    $region12: #{tpu_custom_call.1} parent=1 // pred_region
      _
    $region13: #{tpu_custom_call.1} parent=1 // pred_fallthru
      _
    // Predicated region
    $region14: #{tpu_custom_call.1} parent=1 // pred_check
      _
    $region15: #{tpu_custom_call.1} parent=1 // pred_check_branch
      %27 = sbr.rel (0) target = $region17
    $region16: #{tpu_custom_call.1} parent=1 // pred_region
      %s29 = ssub.s32 256, 256
      %30 = vsyncadd [#allocation6], %s29
      %s31 = sshll.u32 [#allocation5], 4
      %s32 = int_to_ptr.vmem [resolvable:$true] %s31
      %37 = dma.hbm_to_vmem [thread:$0]  %s3, 256, %s32, [#allocation6], 128, 128, 8
    $region17: #{tpu_custom_call.1} parent=1 // pred_fallthru
      _
    // Predicated region
    $region18: #{tpu_custom_call.1} parent=1 // pred_check
      _
    $region19: #{tpu_custom_call.1} parent=1 // pred_check_branch
      %39 = sbr.rel (0) target = $region21
    $region20: #{tpu_custom_call.1} parent=1 // pred_region
      %40 = dma.done [#allocation3], 128
    $region21: #{tpu_custom_call.1} parent=1 // pred_fallthru
      _
    // Predicated region
    $region22: #{tpu_custom_call.1} parent=1 // pred_check
      _
    $region23: #{tpu_custom_call.1} parent=1 // pred_check_branch
      %42 = sbr.rel (0) target = $region25
    $region24: #{tpu_custom_call.1} parent=1 // pred_region
      %43 = dma.done [#allocation6], 256
    $region25: #{tpu_custom_call.1} parent=1 // pred_fallthru
      _
    %v45 = vld [vmem:[#allocation2] sm:$0xff]
    %v46 = vpack.c.bf16 %v45, %v45
    %v47 = vld [vmem:[%s2] sm:$0xf]
    %v48 = vld [vmem:[%s2 + $0x4] sm:$0xf]
    %v49 = vld [vmem:[%s2 + $0x8] sm:$0xf]
    %v50 = vld [vmem:[%s2 + $0xc] sm:$0xf]
    %v51 = vld [vmem:[%s1] sm:$0xff]
    %v52 = vlaneseq
    %v53 = vand.u32 %v52, 127
    %54 = vset.pattern.permute.xlu0 0
    %55 = vperm.xlu0 %54, %v51
    %v56 = vpop.permute.xlu0 %55
    %vm57 = vcmp.eq.s32.totalorder %v56, %v53
    %v58 = vsel %vm57, 1, 0
    %v59 = vcvt.s32.f32 %v58
    %v60 = vld [vmem:[#allocation5] sm:$0xff]
    %v61 = vld [vmem:[#allocation5 + $0x8] sm:$0xff]
    %vm62 = vcmask 130048
    %v64 = vsel %vm62, %v59, 0
    %66 = vmatprep.subr.mxu0 0.0
    %67 = vmatpush1.msra.mxu0 %v60
    %68 = vmatprep.subr.mxu0 0.0
    %69 = vmatpush1.msra.mxu0 %v61
    %70 = vmatprep.subr.mxu0 0.0
    %71 = vmatpush1.msra.mxu0 0.0
    %72 = vmatprep.subr.mxu0 0.0
    %73 = vmatpush1.msra.mxu0 0.0
    %74 = vmatprep.subr.mxu0 0.0
    %75 = vmatpush1.msra.mxu0 0.0
    %76 = vmatprep.subr.mxu0 0.0
    %77 = vmatpush1.msra.mxu0 0.0
    %78 = vmatprep.subr.mxu0 0.0
    %79 = vmatpush1.msra.mxu0 0.0
    %80 = vmatprep.subr.mxu0 0.0
    %81 = vmatpush1.msra.mxu0 0.0
    %82 = vmatprep.subr.mxu0 0.0
    %83 = vmatpush1.msra.mxu0 0.0
    %84 = vmatprep.subr.mxu0 0.0
    %85 = vmatpush1.msra.mxu0 0.0
    %86 = vmatprep.subr.mxu0 0.0
    %87 = vmatpush1.msra.mxu0 0.0
    %88 = vmatprep.subr.mxu0 0.0
    %89 = vmatpush1.msra.mxu0 0.0
    %90 = vmatprep.subr.mxu0 0.0
    %91 = vmatpush1.msra.mxu0 0.0
    %92 = vmatprep.subr.mxu0 0.0
    %93 = vmatpush1.msra.mxu0 0.0
    %94 = vmatprep.subr.mxu0 0.0
    %95 = vmatpush1.msra.mxu0 0.0
    %96 = vmatprep.subr.mxu0 0.0
    %97 = vmatpush1.msra.mxu0 0.0
    %98 = vmatprep.subr.mxu0 0.0
    %99 = vmatpush1.msra.mxu0 0.0
    %100 = vmatprep.subr.mxu0 0.0
    %101 = vmatpush1.msra.mxu0 0.0
    %102 = vmatprep.subr.mxu0 0.0
    %103 = vmatpush1.msra.mxu0 0.0
    %104 = vmatprep.subr.mxu0 0.0
    %105 = vmatpush1.msra.mxu0 0.0
    %106 = vmatprep.subr.mxu0 0.0
    %107 = vmatpush1.msra.mxu0 0.0
    %108 = vmatprep.subr.mxu0 0.0
    %109 = vmatpush1.msra.mxu0 0.0
    %110 = vmatprep.subr.mxu0 0.0
    %111 = vmatpush1.msra.mxu0 0.0
    %112 = vmatprep.subr.mxu0 0.0
    %113 = vmatpush1.msra.mxu0 0.0
    %114 = vmatprep.subr.mxu0 0.0
    %115 = vmatpush1.msra.mxu0 0.0
    %116 = vmatprep.subr.mxu0 0.0
    %117 = vmatpush1.msra.mxu0 0.0
    %118 = vmatprep.subr.mxu0 0.0
    %119 = vmatpush1.msra.mxu0 0.0
    %120 = vmatprep.subr.mxu0 0.0
    %121 = vmatpush1.msra.mxu0 0.0
    %122 = vmatprep.subr.mxu0 0.0
    %123 = vmatpush1.msra.mxu0 0.0
    %124 = vmatprep.subr.mxu0 0.0
    %125 = vmatpush1.msra.mxu0 0.0
    %126 = vmatprep.subr.mxu0 0.0
    %127 = vmatpush1.msra.mxu0 0.0
    %128 = vmatprep.subr.mxu0 0.0
    %129 = vmatpush1.msra.mxu0 0.0
    %130 = vmatprep.mubr.f32.mxu0 0.0
    %131 = vmatmul.mubr.f32.gmra.mrb[0].mxu0 %v64
    %v132 = vpop.f32.mrb[0].mxu0
    %v133 = vadd.f32 0.0, %v132
    %v134 = vpop.f32.mrb[0].mxu0
    %135 = vdwg.mxu0
    %v140 = vunpack.c.l.b16 %v47
    %v141 = vunpack.c.l.b16 %v48
    %v142 = vunpack.c.l.b16 %v49
    %v143 = vunpack.c.l.b16 %v50
    %v144 = vpack.c.b16 %v141, %v140
    %v145 = vpack.c.b16 %v143, %v142
    %vm148 = vcmask 261120
    %v150 = vsel %vm148, %v46, 0
    %152 = vmatprep.subr.bf16.mxu0 0
    %153 = vmatpush1.bf16.msra.mxu0 %v144
    %154 = vmatprep.subr.bf16.mxu0 0
    %155 = vmatpush1.bf16.msra.mxu0 %v145
    %156 = vmatprep.subr.bf16.mxu0 0
    %157 = vmatpush1.bf16.msra.mxu0 0
    %158 = vmatprep.subr.bf16.mxu0 0
    %159 = vmatpush1.bf16.msra.mxu0 0
    %160 = vmatprep.subr.bf16.mxu0 0
    %161 = vmatpush1.bf16.msra.mxu0 0
    %162 = vmatprep.subr.bf16.mxu0 0
    %163 = vmatpush1.bf16.msra.mxu0 0
    %164 = vmatprep.subr.bf16.mxu0 0
    %165 = vmatpush1.bf16.msra.mxu0 0
    %166 = vmatprep.subr.bf16.mxu0 0
    %167 = vmatpush1.bf16.msra.mxu0 0
    %168 = vmatprep.subr.bf16.mxu0 0
    %169 = vmatpush1.bf16.msra.mxu0 0
    %170 = vmatprep.subr.bf16.mxu0 0
    %171 = vmatpush1.bf16.msra.mxu0 0
    %172 = vmatprep.subr.bf16.mxu0 0
    %173 = vmatpush1.bf16.msra.mxu0 0
    %174 = vmatprep.subr.bf16.mxu0 0
    %175 = vmatpush1.bf16.msra.mxu0 0
    %176 = vmatprep.subr.bf16.mxu0 0
    %177 = vmatpush1.bf16.msra.mxu0 0
    %178 = vmatprep.subr.bf16.mxu0 0
    %179 = vmatpush1.bf16.msra.mxu0 0
    %180 = vmatprep.subr.bf16.mxu0 0
    %181 = vmatpush1.bf16.msra.mxu0 0
    %182 = vmatprep.subr.bf16.mxu0 0
    %183 = vmatpush1.bf16.msra.mxu0 0
    %184 = vmatprep.mubr.bf16.mxu0 0
    %185 = vmatmul.mubr.bf16.gmra.mrb[0].mxu0 %v150
    %v186 = vpop.f32.mrb[0].mxu0
    %v187 = vadd.f32 %v133, %v186
    %v188 = vpop.f32.mrb[0].mxu0
    %v189 = vpop.f32.mrb[0].mxu0
    %v190 = vpop.f32.mrb[0].mxu0
    %191 = vdwg.mxu0
    %192 = vst.msk [vmem:[#allocation7] sm:$0xff] %vm148, %v187
    // Predicated region
    $region26: #{tpu_custom_call.1} parent=1 // pred_check
      _
    $region27: #{tpu_custom_call.1} parent=1 // pred_check_branch
      %194 = sbr.rel (0) target = $region29
    $region28: #{tpu_custom_call.1} parent=1 // pred_region
      %s196 = ssub.s32 128, 128
      %197 = vsyncadd [#allocation4], %s196
      %s199 = sshll.u32 [#allocation7], 4
      %s200 = int_to_ptr.vmem [resolvable:$true] %s199
      %202 = dma.vmem_to_hbm [thread:$0]  %s200, 128, %s4, [#allocation4]
    $region29: #{tpu_custom_call.1} parent=1 // pred_fallthru
      _
    // Predicated region
    $region30: #{tpu_custom_call.1} parent=1 // pred_check
      _
    $region31: #{tpu_custom_call.1} parent=1 // pred_check_branch
      %204 = sbr.rel (0) target = $region33
    $region32: #{tpu_custom_call.1} parent=1 // pred_region
      %205 = dma.done [#allocation4], 128
    $region33: #{tpu_custom_call.1} parent=1 // pred_fallthru
      _
    %206 = vsyncpa [#allocation3], 1
    %207 = vsyncpa [#allocation6], 1
    %208 = vsyncpa [#allocation4], 1

</llo_original>
